<compile_context>
chip_gen: v7x
topology: tpu7x:2x2x1
jax: 0.10.0
libtpu: 0.0.40
codegen_flags: <defaults>
</compile_context>

<pallas_src>
import math
from typing import Any, NamedTuple

import jax
import jax.numpy as jnp
from jax.experimental import pallas as pl
from jax.experimental.pallas import tpu as pltpu

_MIB = 1024 * 1024


def _round_up(x, m):
    return ((x + m - 1) // m) * m


def _cdiv(a, b):
    return (a + b - 1) // b


# -----------------------------------------------------------------------------
# Kernels
# -----------------------------------------------------------------------------
def ffn_kernel_inplace(x_ref, w1_ref, b1_ref, w2_ref, b2_ref, o_ref):
    """f32-output variant: accumulate directly into the resident output block."""
    k = pl.program_id(1)

    @pl.when(k == 0)
    def _():
        o_ref[...] = jnp.zeros(o_ref.shape, o_ref.dtype) + b2_ref[...]

    h = jnp.dot(x_ref[...], w1_ref[...], preferred_element_type=jnp.float32)
    h = jnp.maximum(h + b1_ref[...], 0.0)          # bias + ReLU in f32
    # dropout: identity (eval mode)
    o_ref[...] += jnp.dot(h.astype(w2_ref.dtype), w2_ref[...],
                          preferred_element_type=jnp.float32)


def ffn_kernel_scratch(x_ref, w1_ref, b1_ref, w2_ref, b2_ref, o_ref, acc_ref):
    """Low-precision-output variant: f32 VMEM accumulator, single cast at the end."""
    k = pl.program_id(1)

    @pl.when(k == 0)
    def _():
        acc_ref[...] = jnp.zeros_like(acc_ref) + b2_ref[...]

    h = jnp.dot(x_ref[...], w1_ref[...], preferred_element_type=jnp.float32)
    h = jnp.maximum(h + b1_ref[...], 0.0)
    # dropout: identity (eval mode)
    acc_ref[...] += jnp.dot(h.astype(w2_ref.dtype), w2_ref[...],
                            preferred_element_type=jnp.float32)

    @pl.when(k == pl.num_programs(1) - 1)
    def _():
        o_ref[...] = acc_ref[...].astype(o_ref.dtype)


# -----------------------------------------------------------------------------
# Parameter preparation (hoisted out of the per-call path)
# -----------------------------------------------------------------------------
class FFNParams(NamedTuple):
    w1: Any       # (d_model, d_ff_p), compute dtype
    b1: Any       # (1, d_ff_p), f32
    w2: Any       # (d_ff_p, d_model), compute dtype
    b2: Any       # (1, d_model), f32
    d_model: int
    d_ff: int
    d_ff_p: int


def prepare_ffn_params(w1, b1, w2, b2, *, compute_dtype=jnp.bfloat16):
    """Pad d_ff to a multiple of 128 and cast weights to the MXU dtype, once."""
    d_model, d_ff = w1.shape
    d_ff_p = max(128, _round_up(d_ff, 128))
    if d_ff_p != d_ff:
        w1 = jnp.pad(w1, ((0, 0), (0, d_ff_p - d_ff)))
        b1 = jnp.pad(b1, ((0, d_ff_p - d_ff),))
        w2 = jnp.pad(w2, ((0, d_ff_p - d_ff), (0, 0)))
    return FFNParams(
        w1=w1.astype(compute_dtype),
        b1=b1.reshape(1, d_ff_p).astype(jnp.float32),
        w2=w2.astype(compute_dtype),
        b2=b2.reshape(1, d_model).astype(jnp.float32),
        d_model=d_model, d_ff=d_ff, d_ff_p=d_ff_p)


# -----------------------------------------------------------------------------
# Tile selection (per-generation VMEM budget)
# -----------------------------------------------------------------------------
def _vmem_capacity_bytes():
    try:
        return int(pltpu.get_tpu_info().vmem_capacity_bytes)
    except Exception:
        return 64 * _MIB          # conservative (v7x-sized) fallback


def _select_tiles(n, d_model, d_ff_p, out_itemsize, compute_itemsize, vmem_cap,
                  tm_override=None, tff_override=None):
    sub = 16 if compute_itemsize == 2 else 8     # bf16 packs 16 rows / sublane group

    # Per-generation scoped-VMEM limit.
    if vmem_cap >= 100 * _MIB:                   # v5e / v6e: 128 MiB physical
        vmem_limit = 100 * _MIB
        small_vmem = False
    else:                                        # v7x: 64 MiB physical (or unknown)
        vmem_limit = min(max(vmem_cap - 8 * _MIB, 32 * _MIB), 56 * _MIB)
        small_vmem = True
    budget = int(vmem_limit * 0.85)

    # tff: a multiple-of-128 divisor of d_ff_p.  tff does not change total
    # weight HBM traffic, so on v7x with very wide models spend VMEM on tm.
    if tff_override is not None:
        tff_max = tff_override
    else:
        tff_max = 256 if (small_vmem and d_model >= 8192) else 512
    tff_cands = [t for t in range(tff_max, 0, -128)
                 if t <= d_ff_p and d_ff_p % t == 0]
    if not tff_cands:
        tff_cands = [d_ff_p]
    tff = tff_cands[0]

    # tm: weight-streaming arithmetic intensity is ~tm FLOP/byte.
    if tm_override is not None:
        tm = tm_override
    else:
        tm = 1024 if d_model <= 2048 else 512
    tm = min(tm, _round_up(n, sub))
    tm = max(sub, _round_up(tm, sub))

    def vmem_bytes(tm_, tff_):
        acc = tm_ * d_model * 4 if out_itemsize != 4 else 0      # f32 scratch
        x_t = 2 * tm_ * d_model * compute_itemsize                # double-buffered x
        o_t = 2 * tm_ * d_model * out_itemsize                    # output block
        w_t = 2 * 2 * d_model * tff_ * compute_itemsize           # W1 + W2 slices (x2 buf)
        b_t = 2 * (tff_ + d_model) * 4
        return acc + x_t + o_t + w_t + b_t

    if tm_override is None:
        while vmem_bytes(tm, tff) > budget and tm > 256:
            tm = max(256, tm // 2)
    if tff_override is None:
        idx = 0
        while vmem_bytes(tm, tff) > budget and idx + 1 < len(tff_cands):
            idx += 1
            tff = tff_cands[idx]

    # v7x has 2 TensorCores: make sure the "parallel" token axis has >= 2 tiles
    # so both cores get work (no-op on the tiny-n and v5e/v6e cases).
    if tm_override is None and small_vmem:
        while tm > 256 and _cdiv(n, tm) < 2:
            tm = max(256, tm // 2)

    return tm, tff, vmem_limit


# -----------------------------------------------------------------------------
# Wrapper
# -----------------------------------------------------------------------------
def feed_forward_block(x, params: FFNParams, *, tm=None, tff=None,
                       weight_buffers=2):
    """x: (batch, seq, d_model); params: output of prepare_ffn_params."""
    batch, seq, d_model = x.shape
    assert d_model == params.d_model
    out_dtype = x.dtype
    compute_dtype = params.w1.dtype
    comp_isz = jnp.dtype(compute_dtype).itemsize
    out_isz = jnp.dtype(out_dtype).itemsize
    d_ff_p = params.d_ff_p
    n = batch * seq

    vmem_cap = _vmem_capacity_bytes()
    tm, tff, vmem_limit = _select_tiles(
        n, d_model, d_ff_p, out_isz, comp_isz, vmem_cap,
        tm_override=tm, tff_override=tff)

    # --- token-axis padding (activation cast is per-call; weights are prepared) ---
    n_p = _round_up(n, tm)
    x2d = x.reshape(n, d_model)
    if n_p != n:
        x2d = jnp.pad(x2d, ((0, n_p - n), (0, 0)))
    x2d = x2d.astype(compute_dtype)

    grid = (n_p // tm, d_ff_p // tff)
    n_i = grid[0]

    # Optional deeper weight-slice buffering (only useful for small d_model
    # where per-k-step matmul time is short; off by default).
    wkw = {"pipeline_mode": pl.Buffered(weight_buffers)} if weight_buffers != 2 else {}

    in_specs = [
        pl.BlockSpec((tm, d_model), lambda i, k: (i, 0)),            # x tile
        pl.BlockSpec((d_model, tff), lambda i, k: (0, k), **wkw),    # W1 slice
        pl.BlockSpec((1, tff), lambda i, k: (0, k)),                 # b1 slice
        pl.BlockSpec((tff, d_model), lambda i, k: (k, 0), **wkw),    # W2 slice
        pl.BlockSpec((1, d_model), lambda i, k: (0, 0)),             # b2
    ]
    out_spec = pl.BlockSpec((tm, d_model), lambda i, k: (i, 0))

    if out_dtype == jnp.float32:
        kernel = ffn_kernel_inplace
        scratch_shapes = []
    else:
        kernel = ffn_kernel_scratch
        scratch_shapes = [pltpu.VMEM((tm, d_model), jnp.float32)]

    flops = 4 * n_p * d_model * d_ff_p            # two matmuls, 2 flops / MAC
    bytes_accessed = (
        x2d.size * comp_isz
        + (params.w1.size + params.w2.size) * comp_isz * n_i   # re-streamed per i tile
        + (params.b1.size + params.b2.size) * 4 * n_i
        + n_p * d_model * out_isz)

    out2d = pl.pallas_call(
        kernel,
        out_shape=jax.ShapeDtypeStruct((n_p, d_model), out_dtype),
        grid_spec=pltpu.PrefetchScalarGridSpec(
            num_scalar_prefetch=0,
            grid=grid,
            in_specs=in_specs,
            out_specs=out_spec,
            scratch_shapes=scratch_shapes,
        ),
        compiler_params=pltpu.CompilerParams(
            dimension_semantics=("parallel", "arbitrary"),
            vmem_limit_bytes=vmem_limit,
        ),
        cost_estimate=pl.CostEstimate(
            flops=flops, transcendentals=0, bytes_accessed=bytes_accessed),
    )(x2d, params.w1, params.b1, params.w2, params.b2)

    return out2d[:n].reshape(batch, seq, d_model)


# -----------------------------------------------------------------------------
# Reference / init / tests
# -----------------------------------------------------------------------------
def _init_linear(key, fan_in, fan_out, dtype=jnp.float32):
    """Mimic torch.nn.Linear default init: U(-1/sqrt(fan_in), 1/sqrt(fan_in))."""
    kw, kb = jax.random.split(key)
    bound = 1.0 / math.sqrt(fan_in)
    w = jax.random.uniform(kw, (fan_in, fan_out), dtype, minval=-bound, maxval=bound)
    b = jax.random.uniform(kb, (fan_out,), dtype, minval=-bound, maxval=bound)
    return w, b


def _reference(x, w1, b1, w2, b2):
    x32 = x.astype(jnp.float32)
    return jnp.maximum(x32 @ w1 + b1, 0.0) @ w2 + b2


if __name__ == "__main__":
    key = jax.random.PRNGKey(0)

    # ---- test 1: small shapes from the module spec (f32, in-place output) ----
    batch, seq, d_model, d_ff = 2, 8, 32, 64
    kx, k1, k2, key = jax.random.split(key, 4)
    x = jax.random.normal(kx, (batch, seq, d_model), jnp.float32)
    w1, b1 = _init_linear(k1, d_model, d_ff)
    w2, b2 = _init_linear(k2, d_ff, d_model)
    params = prepare_ffn_params(w1, b1, w2, b2)    # prepared once, reused per call

    out = jax.block_until_ready(feed_forward_block(x, params))
    ref = _reference(x, w1, b1, w2, b2)
    assert out.shape == (batch, seq, d_model)
    assert jnp.allclose(out, ref, atol=2e-2, rtol=2e-2), "mismatch vs reference (test 1)"

    # ---- test 2: token padding + multi-step d_ff accumulation (f32 path) ----
    batch, seq, d_model, d_ff = 2, 10, 128, 192
    kx, k1, k2, key = jax.random.split(key, 4)
    x = jax.random.normal(kx, (batch, seq, d_model), jnp.float32)
    w1, b1 = _init_linear(k1, d_model, d_ff)
    w2, b2 = _init_linear(k2, d_ff, d_model)
    params = prepare_ffn_params(w1, b1, w2, b2)

    out = jax.block_until_ready(feed_forward_block(x, params, tff=128))
    ref = _reference(x, w1, b1, w2, b2)
    assert out.shape == (batch, seq, d_model)
    assert jnp.allclose(out, ref, atol=2e-2, rtol=2e-2), "mismatch vs reference (test 2)"

    # ---- test 3: bf16 activations/outputs (f32-scratch accumulator path) ----
    batch, seq, d_model, d_ff = 2, 16, 128, 256
    kx, k1, k2, key = jax.random.split(key, 4)
    x = jax.random.normal(kx, (batch, seq, d_model), jnp.float32).astype(jnp.bfloat16)
    w1, b1 = _init_linear(k1, d_model, d_ff)
    w2, b2 = _init_linear(k2, d_ff, d_model)
    params = prepare_ffn_params(w1, b1, w2, b2)

    out = jax.block_until_ready(feed_forward_block(x, params, tff=128))
    ref = _reference(x, w1, b1, w2, b2)
    assert out.shape == (batch, seq, d_model)
    assert out.dtype == jnp.bfloat16
    assert jnp.allclose(out.astype(jnp.float32), ref, atol=5e-2, rtol=5e-2), \
        "mismatch vs reference (test 3)"

    print("KERNEL_OK")
</pallas_src>

<mosaic_0001>
module attributes {stable_mosaic.version = 11 : i64} {
  func.func @ffn_kernel_inplace(%arg0: i32, %arg1: i32, %arg2: memref<16x32xbf16, #tpu.memory_space<vmem>>, %arg3: memref<32x128xbf16, #tpu.memory_space<vmem>>, %arg4: memref<1x128xf32, #tpu.memory_space<vmem>>, %arg5: memref<128x32xbf16, #tpu.memory_space<vmem>>, %arg6: memref<1x32xf32, #tpu.memory_space<vmem>>, %arg7: memref<16x32xf32, #tpu.memory_space<vmem>>) attributes {dimension_semantics = [#tpu.dimension_semantics<parallel>, #tpu.dimension_semantics<arbitrary>], iteration_bounds = array<i64: 1, 1>, scalar_prefetch = 0 : i64, scratch_operands = 0 : i64, tpu.core_type = #tpu.core_type<tc>, window_params = [{transform_indices = @transform_0, window_bounds = array<i64: 16, 32>}, {transform_indices = @transform_1, window_bounds = array<i64: 32, 128>}, {transform_indices = @transform_2, window_bounds = array<i64: 1, 128>}, {transform_indices = @transform_3, window_bounds = array<i64: 128, 32>}, {pipeline_mode = #tpu.pipeline_mode<synchronous>, transform_indices = @transform_4, window_bounds = array<i64: 1, 32>}, {transform_indices = @transform_5, window_bounds = array<i64: 16, 32>}]} {
    %c0_i32 = arith.constant 0 : i32
    %0 = arith.cmpi eq, %arg1, %c0_i32 : i32
    %1 = arith.extui %0 : i1 to i32
    %c0_i32_0 = arith.constant 0 : i32
    %2 = arith.cmpi ne, %1, %c0_i32_0 : i32
    scf.if %2 {
      %cst_14 = arith.constant 0.000000e+00 : f32
      %17 = vector.broadcast %cst_14 : f32 to vector<16x32xf32>
      %c0_15 = arith.constant 0 : index
      %c0_16 = arith.constant 0 : index
      %18 = vector.load %arg6[%c0_15, %c0_16] : memref<1x32xf32, #tpu.memory_space<vmem>>, vector<1x32xf32>
      %19 = vector.broadcast %18 : vector<1x32xf32> to vector<16x32xf32>
      %20 = arith.addf %17, %19 : vector<16x32xf32>
      %c0_17 = arith.constant 0 : index
      %c0_18 = arith.constant 0 : index
      %21 = vector.load %arg7[%c0_17, %c0_18] : memref<16x32xf32, #tpu.memory_space<vmem>>, vector<16x32xf32>
      tpu.vector_store %arg7[%c0_17, %c0_18], %20 {strides = array<i32>} : memref<16x32xf32, #tpu.memory_space<vmem>>, vector<16x32xf32>,
    } else {
    }
    %c0 = arith.constant 0 : index
    %c0_1 = arith.constant 0 : index
    %3 = vector.load %arg2[%c0, %c0_1] : memref<16x32xbf16, #tpu.memory_space<vmem>>, vector<16x32xbf16>
    %c0_2 = arith.constant 0 : index
    %c0_3 = arith.constant 0 : index
    %4 = vector.load %arg3[%c0_2, %c0_3] : memref<32x128xbf16, #tpu.memory_space<vmem>>, vector<32x128xbf16>
    %cst = arith.constant dense<0.000000e+00> : vector<16x128xf32>
    %5 = tpu.matmul %3, %4, %cst {dimension_numbers = #tpu.dot_dimension_numbers<[1], [0], [0], [1], [0, 0, 1, 1], [], []>} : vector<16x32xbf16>, vector<32x128xbf16>, vector<16x128xf32> -> vector<16x128xf32>
    %c0_4 = arith.constant 0 : index
    %c0_5 = arith.constant 0 : index
    %6 = vector.load %arg4[%c0_4, %c0_5] : memref<1x128xf32, #tpu.memory_space<vmem>>, vector<1x128xf32>
    %7 = vector.broadcast %6 : vector<1x128xf32> to vector<16x128xf32>
    %8 = arith.addf %5, %7 : vector<16x128xf32>
    %cst_6 = arith.constant 0.000000e+00 : f32
    %9 = vector.broadcast %cst_6 : f32 to vector<16x128xf32>
    %10 = arith.maximumf %8, %9 : vector<16x128xf32>
    %c0_7 = arith.constant 0 : index
    %c0_8 = arith.constant 0 : index
    %11 = vector.load %arg7[%c0_7, %c0_8] : memref<16x32xf32, #tpu.memory_space<vmem>>, vector<16x32xf32>
    %12 = arith.truncf %10 : vector<16x128xf32> to vector<16x128xbf16>
    %c0_9 = arith.constant 0 : index
    %c0_10 = arith.constant 0 : index
    %13 = vector.load %arg5[%c0_9, %c0_10] : memref<128x32xbf16, #tpu.memory_space<vmem>>, vector<128x32xbf16>
    %cst_11 = arith.constant dense<0.000000e+00> : vector<16x32xf32>
    %14 = tpu.matmul %12, %13, %cst_11 {dimension_numbers = #tpu.dot_dimension_numbers<[1], [0], [0], [1], [0, 0, 1, 1], [], []>} : vector<16x128xbf16>, vector<128x32xbf16>, vector<16x32xf32> -> vector<16x32xf32>
    %15 = arith.addf %11, %14 : vector<16x32xf32>
    %c0_12 = arith.constant 0 : index
    %c0_13 = arith.constant 0 : index
    %16 = vector.load %arg7[%c0_12, %c0_13] : memref<16x32xf32, #tpu.memory_space<vmem>>, vector<16x32xf32>
    tpu.vector_store %arg7[%c0_12, %c0_13], %15 {strides = array<i32>} : memref<16x32xf32, #tpu.memory_space<vmem>>, vector<16x32xf32>,
    return
  }
  func.func @transform_0(%arg0: i32, %arg1: i32) -> (i32, i32) {
    %c0_i32 = arith.constant 0 : i32
    %c0_i32_0 = arith.constant 0 : i32
    return %arg0, %c0_i32 : i32, i32
  }
  func.func @transform_1(%arg0: i32, %arg1: i32) -> (i32, i32) {
    %c0_i32 = arith.constant 0 : i32
    %c0_i32_0 = arith.constant 0 : i32
    return %c0_i32, %arg1 : i32, i32
  }
  func.func @transform_2(%arg0: i32, %arg1: i32) -> (i32, i32) {
    %c0_i32 = arith.constant 0 : i32
    %c0_i32_0 = arith.constant 0 : i32
    return %c0_i32, %arg1 : i32, i32
  }
  func.func @transform_3(%arg0: i32, %arg1: i32) -> (i32, i32) {
    %c0_i32 = arith.constant 0 : i32
    %c0_i32_0 = arith.constant 0 : i32
    return %arg1, %c0_i32 : i32, i32
  }
  func.func @transform_4(%arg0: i32, %arg1: i32) -> (i32, i32) {
    %c0_i32 = arith.constant 0 : i32
    %c0_i32_0 = arith.constant 0 : i32
    %c0_i32_1 = arith.constant 0 : i32
    return %c0_i32, %c0_i32_0 : i32, i32
  }
  func.func @transform_5(%arg0: i32, %arg1: i32) -> (i32, i32) {
    %c0_i32 = arith.constant 0 : i32
    %c0_i32_0 = arith.constant 0 : i32
    return %arg0, %c0_i32 : i32, i32
  }
}

</mosaic_0001>

<llo_original>
// kernel: tpu_custom_call.1
$region0: #{tpu_custom_call.1}
  #allocation0 [shape = 'u32[]', space=smem, size = 0x4, offset = 0x4, fixed_abs, tag = 'smem constant byte address 0x4 - core index']
  #allocation1 [shape = 'u32[144,128]{1,0:T(1,128)}', space=vmem, size = 0x12000, scoped, tag = 'internal scratch']
  %s0 = inlined_call_operand.vmem [shape: bf16[16,32], index: 0, kind: input, shape index: {}]
  %s1 = inlined_call_operand.vmem [shape: bf16[32,128], index: 1, kind: input, shape index: {}]
  %s2 = inlined_call_operand.vmem [shape: f32[1,128], index: 2, kind: input, shape index: {}]
  %s3 = inlined_call_operand.vmem [shape: bf16[128,32], index: 3, kind: input, shape index: {}]
  %s4 = inlined_call_operand.vmem [shape: f32[1,32], index: 4, kind: input, shape index: {}]
  %s5 = inlined_call_operand.hbm [shape: f32[16,32], index: 5, kind: output, shape index: {}]
  %s6 = sld [smem:[#allocation0]]
  $region34: #{tpu_custom_call.1} parent=0
    _
  %s8 = ssub.s32 1, %s6
  %s9 = scalar_select 0, %s8, %s6
  $region1: #{tpu_custom_call.1} parent=0
    #allocation2 [shape = 'u8[8192]{0}', space=vmem, size = 0x2000, scoped, tag = 'output window, operand 0, single buffered']
    #allocation3 [shape = 's32[1]{0}', space=sflag, size = 0x4, scoped, tag = 'scoped memory for tpu_custom_call.1']
    %10 = vsyncpa [#allocation3], 0
    // Predicated region
    $region2: #{tpu_custom_call.1} parent=1 // pred_check
      _
    $region3: #{tpu_custom_call.1} parent=1 // pred_check_branch
      %12 = sbr.rel (0) target = $region5
    $region4: #{tpu_custom_call.1} parent=1 // pred_region
      _
    $region5: #{tpu_custom_call.1} parent=1 // pred_fallthru
      _
    // Predicated region
    $region6: #{tpu_custom_call.1} parent=1 // pred_check
      _
    $region7: #{tpu_custom_call.1} parent=1 // pred_check_branch
      %14 = sbr.rel (0) target = $region9
    $region8: #{tpu_custom_call.1} parent=1 // pred_region
      _
    $region9: #{tpu_custom_call.1} parent=1 // pred_fallthru
      _
    // Predicated region
    $region10: #{tpu_custom_call.1} parent=1 // pred_check
      _
    $region11: #{tpu_custom_call.1} parent=1 // pred_check_branch
      %16 = sbr.rel (0) target = $region13
    $region12: #{tpu_custom_call.1} parent=1 // pred_region
      _
    $region13: #{tpu_custom_call.1} parent=1 // pred_fallthru
      _
    // Predicated region
    $region14: #{tpu_custom_call.1} parent=1 // pred_check
      _
    $region15: #{tpu_custom_call.1} parent=1 // pred_check_branch
      %18 = sbr.rel (0) target = $region17
    $region16: #{tpu_custom_call.1} parent=1 // pred_region
      _
    $region17: #{tpu_custom_call.1} parent=1 // pred_fallthru
      _
    // Predicated region
    $region18: #{tpu_custom_call.1} parent=1 // pred_check
      _
    $region19: #{tpu_custom_call.1} parent=1 // pred_check_branch
      %20 = sbr.rel (0) target = $region21
    $region20: #{tpu_custom_call.1} parent=1 // pred_region
      _
    $region21: #{tpu_custom_call.1} parent=1 // pred_fallthru
      _
    %p22 = scmp.eq.s32.totalorder 0, 0
    // Predicated region
    $region22: #{tpu_custom_call.1} parent=1 // pred_check
      %p23 = pneg %p22
    $region23: #{tpu_custom_call.1} parent=1 // pred_check_branch
      %25 = sbr.rel (%p23) target = $region25
    $region24: #{tpu_custom_call.1} parent=1 // pred_region
      %v26 = vld [vmem:[%s4] sm:$0x1]
      %v28 = vlaneseq
      %v29 = vshrl.u32 %v28, 7
      %v30 = vsub.s32 0, %v29
      %v31 = vrot.slane %v26, %v30
      %v33 = vadd.f32 %v31, 0.0
      %vm34 = vcmask 261120
      %35 = vst.msk [vmem:[#allocation2] sm:$0xff] %vm34, %v33
      %36 = vst.msk [vmem:[#allocation2 + $0x8] sm:$0xff] %vm34, %v33
    $region25: #{tpu_custom_call.1} parent=1 // pred_fallthru
      _
    %v37 = vld [vmem:[%s0] sm:$0xf]
    %v38 = vld [vmem:[%s0 + $0x4] sm:$0xf]
    %v39 = vld [vmem:[%s1] sm:$0xf]
    %v40 = vld [vmem:[%s1 + $0x4] sm:$0xf]
    %v41 = vld [vmem:[%s1 + $0x8] sm:$0xf]
    %v42 = vld [vmem:[%s1 + $0xc] sm:$0xf]
    %v43 = vld [vmem:[%s2] sm:$0x1]
    %v45 = vlaneseq
    %v46 = vshrl.u32 %v45, 7
    %v47 = vsub.s32 0, %v46
    %v48 = vrot.slane %v43, %v47
    %v52 = vunpack.c.l.b16 %v37
    %v53 = vunpack.c.l.b16 %v38
    %v54 = vpack.c.b16 %v53, %v52
    %v59 = vunpack.c.l.b16 %v39
    %v60 = vunpack.c.l.b16 %v40
    %v61 = vunpack.c.l.b16 %v41
    %v62 = vunpack.c.l.b16 %v42
    %v63 = vpack.c.b16 %v60, %v59
    %v64 = vpack.c.b16 %v62, %v61
    %vm67 = vcmask 261120
    %v69 = vsel %vm67, %v54, 0
    %71 = vmatprep.subr.bf16.mxu0 0
    %72 = vmatpush1.bf16.msra.mxu0 %v63
    %73 = vmatprep.subr.bf16.mxu0 0
    %74 = vmatpush1.bf16.msra.mxu0 %v64
    %75 = vmatprep.subr.bf16.mxu0 0
    %76 = vmatpush1.bf16.msra.mxu0 0
    %77 = vmatprep.subr.bf16.mxu0 0
    %78 = vmatpush1.bf16.msra.mxu0 0
    %79 = vmatprep.subr.bf16.mxu0 0
    %80 = vmatpush1.bf16.msra.mxu0 0
    %81 = vmatprep.subr.bf16.mxu0 0
    %82 = vmatpush1.bf16.msra.mxu0 0
    %83 = vmatprep.subr.bf16.mxu0 0
    %84 = vmatpush1.bf16.msra.mxu0 0
    %85 = vmatprep.subr.bf16.mxu0 0
    %86 = vmatpush1.bf16.msra.mxu0 0
    %87 = vmatprep.subr.bf16.mxu0 0
    %88 = vmatpush1.bf16.msra.mxu0 0
    %89 = vmatprep.subr.bf16.mxu0 0
    %90 = vmatpush1.bf16.msra.mxu0 0
    %91 = vmatprep.subr.bf16.mxu0 0
    %92 = vmatpush1.bf16.msra.mxu0 0
    %93 = vmatprep.subr.bf16.mxu0 0
    %94 = vmatpush1.bf16.msra.mxu0 0
    %95 = vmatprep.subr.bf16.mxu0 0
    %96 = vmatpush1.bf16.msra.mxu0 0
    %97 = vmatprep.subr.bf16.mxu0 0
    %98 = vmatpush1.bf16.msra.mxu0 0
    %99 = vmatprep.subr.bf16.mxu0 0
    %100 = vmatpush1.bf16.msra.mxu0 0
    %101 = vmatprep.subr.bf16.mxu0 0
    %102 = vmatpush1.bf16.msra.mxu0 0
    %103 = vmatprep.mubr.bf16.mxu0 0
    %104 = vmatmul.mubr.bf16.gmra.mrb[0].mxu0 %v69
    %v105 = vpop.f32.mrb[0].mxu0
    %v106 = vadd.f32 %v48, %v105
    %v107 = vpop.f32.mrb[0].mxu0
    %v108 = vpop.f32.mrb[0].mxu0
    %v109 = vadd.f32 %v48, %v108
    %v110 = vpop.f32.mrb[0].mxu0
    %111 = vdwg.mxu0
    %v112 = vmax.f32 %v106, 0.0
    %v113 = vmax.f32 %v109, 0.0
    %v114 = vld [vmem:[#allocation2] sm:$0xff]
    %v115 = vld [vmem:[#allocation2 + $0x8] sm:$0xff]
    %v116 = vpack.c.bf16 %v113, %v112
    %v117 = vld [vmem:[%s3] sm:$0xf]
    %v118 = vld [vmem:[%s3 + $0x4] sm:$0xf]
    %v119 = vld [vmem:[%s3 + $0x8] sm:$0xf]
    %v120 = vld [vmem:[%s3 + $0xc] sm:$0xf]
    %v121 = vld [vmem:[%s3 + $0x10] sm:$0xf]
    %v122 = vld [vmem:[%s3 + $0x14] sm:$0xf]
    %v123 = vld [vmem:[%s3 + $0x18] sm:$0xf]
    %v124 = vld [vmem:[%s3 + $0x1c] sm:$0xf]
    %v125 = vld [vmem:[%s3 + $0x20] sm:$0xf]
    %v126 = vld [vmem:[%s3 + $0x24] sm:$0xf]
    %v127 = vld [vmem:[%s3 + $0x28] sm:$0xf]
    %v128 = vld [vmem:[%s3 + $0x2c] sm:$0xf]
    %v129 = vld [vmem:[%s3 + $0x30] sm:$0xf]
    %v130 = vld [vmem:[%s3 + $0x34] sm:$0xf]
    %v131 = vld [vmem:[%s3 + $0x38] sm:$0xf]
    %v132 = vld [vmem:[%s3 + $0x3c] sm:$0xf]
    %v149 = vunpack.c.l.b16 %v117
    %v150 = vunpack.c.l.b16 %v118
    %v151 = vunpack.c.l.b16 %v119
    %v152 = vunpack.c.l.b16 %v120
    %v153 = vunpack.c.l.b16 %v121
    %v154 = vunpack.c.l.b16 %v122
    %v155 = vunpack.c.l.b16 %v123
    %v156 = vunpack.c.l.b16 %v124
    %v157 = vunpack.c.l.b16 %v125
    %v158 = vunpack.c.l.b16 %v126
    %v159 = vunpack.c.l.b16 %v127
    %v160 = vunpack.c.l.b16 %v128
    %v161 = vunpack.c.l.b16 %v129
    %v162 = vunpack.c.l.b16 %v130
    %v163 = vunpack.c.l.b16 %v131
    %v164 = vunpack.c.l.b16 %v132
    %v165 = vpack.c.b16 %v150, %v149
    %v166 = vpack.c.b16 %v152, %v151
    %v167 = vpack.c.b16 %v154, %v153
    %v168 = vpack.c.b16 %v156, %v155
    %v169 = vpack.c.b16 %v158, %v157
    %v170 = vpack.c.b16 %v160, %v159
    %v171 = vpack.c.b16 %v162, %v161
    %v172 = vpack.c.b16 %v164, %v163
    %181 = vmatprep.subr.bf16.mxu0 0
    %182 = vmatpush1.bf16.msra.mxu0 %v165
    %183 = vmatprep.subr.bf16.mxu0 0
    %184 = vmatpush1.bf16.msra.mxu0 %v166
    %185 = vmatprep.subr.bf16.mxu0 0
    %186 = vmatpush1.bf16.msra.mxu0 %v167
    %187 = vmatprep.subr.bf16.mxu0 0
    %188 = vmatpush1.bf16.msra.mxu0 %v168
    %189 = vmatprep.subr.bf16.mxu0 0
    %190 = vmatpush1.bf16.msra.mxu0 %v169
    %191 = vmatprep.subr.bf16.mxu0 0
    %192 = vmatpush1.bf16.msra.mxu0 %v170
    %193 = vmatprep.subr.bf16.mxu0 0
    %194 = vmatpush1.bf16.msra.mxu0 %v171
    %195 = vmatprep.subr.bf16.mxu0 0
    %196 = vmatpush1.bf16.msra.mxu0 %v172
    %197 = vmatprep.subr.bf16.mxu0 0
    %198 = vmatpush1.bf16.msra.mxu0 0
    %199 = vmatprep.subr.bf16.mxu0 0
    %200 = vmatpush1.bf16.msra.mxu0 0
    %201 = vmatprep.subr.bf16.mxu0 0
    %202 = vmatpush1.bf16.msra.mxu0 0
    %203 = vmatprep.subr.bf16.mxu0 0
    %204 = vmatpush1.bf16.msra.mxu0 0
    %205 = vmatprep.subr.bf16.mxu0 0
    %206 = vmatpush1.bf16.msra.mxu0 0
    %207 = vmatprep.subr.bf16.mxu0 0
    %208 = vmatpush1.bf16.msra.mxu0 0
    %209 = vmatprep.subr.bf16.mxu0 0
    %210 = vmatpush1.bf16.msra.mxu0 0
    %211 = vmatprep.subr.bf16.mxu0 0
    %212 = vmatpush1.bf16.msra.mxu0 0
    %213 = vmatprep.mubr.bf16.mxu0 0
    %214 = vmatmul.mubr.bf16.gmra.mrb[0].mxu0 %v116
    %v215 = vpop.f32.mrb[0].mxu0
    %v216 = vadd.f32 0.0, %v215
    %v217 = vpop.f32.mrb[0].mxu0
    %v218 = vpop.f32.mrb[0].mxu0
    %v219 = vadd.f32 0.0, %v218
    %v220 = vpop.f32.mrb[0].mxu0
    %221 = vdwg.mxu0
    %v222 = vadd.f32 %v114, %v216
    %v223 = vadd.f32 %v115, %v219
    %224 = vst.msk [vmem:[#allocation2] sm:$0xff] %vm67, %v222
    %225 = vst.msk [vmem:[#allocation2 + $0x8] sm:$0xff] %vm67, %v223
    // Predicated region
    $region26: #{tpu_custom_call.1} parent=1 // pred_check
      _
    $region27: #{tpu_custom_call.1} parent=1 // pred_check_branch
      %227 = sbr.rel (0) target = $region29
    $region28: #{tpu_custom_call.1} parent=1 // pred_region
      %s229 = ssub.s32 256, 256
      %230 = vsyncadd [#allocation3], %s229
      %s231 = sshll.u32 [#allocation2], 4
      %s232 = int_to_ptr.vmem [resolvable:$true] %s231
      %237 = dma.vmem_to_hbm [thread:$0]  %s232, 256, %s5, [#allocation3], 128, 128, 8
    $region29: #{tpu_custom_call.1} parent=1 // pred_fallthru
      _
    // Predicated region
    $region30: #{tpu_custom_call.1} parent=1 // pred_check
      _
    $region31: #{tpu_custom_call.1} parent=1 // pred_check_branch
      %239 = sbr.rel (0) target = $region33
    $region32: #{tpu_custom_call.1} parent=1 // pred_region
      %240 = dma.done [#allocation3], 256
    $region33: #{tpu_custom_call.1} parent=1 // pred_fallthru
      _
    %241 = vsyncpa [#allocation3], 1

</llo_original>
